<compile_context>
chip_gen: v6e
topology: v6e:2x2x1
jax: 0.10.0
libtpu: 0.0.40
codegen_flags: <defaults>
</compile_context>

<pallas_src>
import functools

import jax
import jax.numpy as jnp
from jax.experimental import pallas as pl
from jax.experimental.pallas import tpu as pltpu

LEAKY_SLOPE = 0.01              # PyTorch nn.LeakyReLU default negative_slope
LAYER_DIMS = (64, 32, 16, 8, 4)  # hidden widths of the Discriminator


def _round_up(v, m):
    return -(-v // m) * m


def discriminator_kernel(x_ref, *refs):
    """x_ref: [input_dim, block_b] bf16 (batch on lanes).
    refs: (w1, b1, ..., w6, b6, o_ref); w: [out, in] bf16, b: [out, 1] f32,
    o_ref: [output_dim, block_b] f32."""
    *param_refs, o_ref = refs
    n_layers = len(param_refs) // 2

    h = x_ref[...]                                       # [in, bb] bf16
    for li in range(n_layers):
        w_ref = param_refs[2 * li]
        b_ref = param_refs[2 * li + 1]
        # bf16 MXU matmul, f32 accumulation; bias broadcasts along lanes.
        y = jnp.dot(w_ref[...], h, preferred_element_type=jnp.float32) + b_ref[...]
        if li < n_layers - 1:
            y = jnp.where(y > 0, y, LEAKY_SLOPE * y)     # LeakyReLU in f32 (VPU)
            h = y.astype(x_ref.dtype)                    # back to bf16 for next MXU pass
        else:
            # sigmoid: exp on EUP, divide via approx reciprocal (EUP vrcp slot)
            o_ref[...] = pl.reciprocal(1.0 + jnp.exp(-y), approx=True).astype(o_ref.dtype)


def init_discriminator_params(key, input_dim, output_dim, dtype=jnp.float32):
    """Synthetic parameters in PyTorch layout: w [out, in], b [out, 1]."""
    dims = (input_dim,) + LAYER_DIMS + (output_dim,)
    params = []
    for i in range(len(dims) - 1):
        key, kw, kb = jax.random.split(key, 3)
        bound = 1.0 / (dims[i] ** 0.5)
        w = jax.random.uniform(kw, (dims[i + 1], dims[i]), dtype, -bound, bound)
        b = jax.random.uniform(kb, (dims[i + 1], 1), dtype, -bound, bound)
        params.append((w, b))
    return params


@functools.partial(jax.jit, static_argnames=("block_b",))
def discriminator_forward(x, params, block_b=512):
    """x: [B, input_dim] float32; params: list of (w [out, in], b [out, 1])."""
    B, input_dim = x.shape
    output_dim = params[-1][0].shape[0]

    # Batch tile: multiple of 128 lanes; cap so large batches split into >=2 grid
    # steps (keeps both TensorCores busy on v7x).
    bb = min(_round_up(block_b, 128), max(128, _round_up(-(-B // 2), 128)))
    num_blocks = -(-B // bb)
    b_pad = num_blocks * bb

    # Transposed bf16 activations: features on sublanes, batch on lanes.
    x_t = x.T.astype(jnp.bfloat16)
    if b_pad != B:
        x_t = jnp.pad(x_t, ((0, 0), (0, b_pad - B)))

    flat_params = []
    in_specs = [pl.BlockSpec((input_dim, bb), lambda i: (0, i))]
    for w, b in params:
        flat_params.append(w.astype(jnp.bfloat16))   # MXU operand
        flat_params.append(b.astype(jnp.float32))    # added in f32
        # Tiny weights/biases: whole array resident in VMEM, no pipeline buffers.
        in_specs.append(pl.BlockSpec(memory_space=pltpu.MemorySpace.VMEM))
        in_specs.append(pl.BlockSpec(memory_space=pltpu.MemorySpace.VMEM))

    out_t = pl.pallas_call(
        discriminator_kernel,
        out_shape=jax.ShapeDtypeStruct((output_dim, b_pad), x.dtype),
        grid=(num_blocks,),
        in_specs=in_specs,
        out_specs=pl.BlockSpec((output_dim, bb), lambda i: (0, i)),
        compiler_params=pltpu.CompilerParams(dimension_semantics=("parallel",)),
    )(x_t, *flat_params)

    return out_t[:, :B].T                              # [B, output_dim]


def discriminator_reference(x, params):
    h = x.astype(jnp.float32)
    n = len(params)
    for i, (w, b) in enumerate(params):
        h = h @ w.T + b[:, 0]
        if i < n - 1:
            h = jnp.where(h > 0, h, LEAKY_SLOPE * h)
    return jax.nn.sigmoid(h).astype(x.dtype)


if __name__ == "__main__":
    key = jax.random.PRNGKey(0)
    k_params, k_x = jax.random.split(key)

    B, input_dim, output_dim = 16, 32, 1
    params = init_discriminator_params(k_params, input_dim, output_dim)
    x = jax.random.normal(k_x, (B, input_dim), dtype=jnp.float32)

    out = jax.block_until_ready(discriminator_forward(x, params))
    ref = jax.block_until_ready(discriminator_reference(x, params))

    assert out.shape == (B, output_dim)
    # bf16 matmul operands (f32 accumulation) -> compare with a loose tolerance.
    assert jnp.allclose(out, ref, atol=2e-2, rtol=0.0), "mismatch vs reference"

    print("KERNEL_OK")
</pallas_src>

<mosaic_0001>
module attributes {stable_mosaic.version = 11 : i64} {
  func.func @discriminator_kernel(%arg0: i32, %arg1: memref<32x128xbf16, #tpu.memory_space<vmem>>, %arg2: memref<64x32xbf16, #tpu.memory_space<vmem>>, %arg3: memref<64x1xf32, #tpu.memory_space<vmem>>, %arg4: memref<32x64xbf16, #tpu.memory_space<vmem>>, %arg5: memref<32x1xf32, #tpu.memory_space<vmem>>, %arg6: memref<16x32xbf16, #tpu.memory_space<vmem>>, %arg7: memref<16x1xf32, #tpu.memory_space<vmem>>, %arg8: memref<8x16xbf16, #tpu.memory_space<vmem>>, %arg9: memref<8x1xf32, #tpu.memory_space<vmem>>, %arg10: memref<4x8xbf16, #tpu.memory_space<vmem>>, %arg11: memref<4x1xf32, #tpu.memory_space<vmem>>, %arg12: memref<1x4xbf16, #tpu.memory_space<vmem>>, %arg13: memref<1x1xf32, #tpu.memory_space<vmem>>, %arg14: memref<1x128xf32, #tpu.memory_space<vmem>>) attributes {dimension_semantics = [#tpu.dimension_semantics<parallel>], iteration_bounds = array<i64: 1>, scalar_prefetch = 0 : i64, scratch_operands = 0 : i64, tpu.core_type = #tpu.core_type<tc>, window_params = [{transform_indices = @transform_0, window_bounds = array<i64: 32, 128>}, {pipeline_mode = #tpu.pipeline_mode<synchronous>, transform_indices = @transform_1, window_bounds = array<i64: 64, 32>}, {pipeline_mode = #tpu.pipeline_mode<synchronous>, transform_indices = @transform_2, window_bounds = array<i64: 64, 1>}, {pipeline_mode = #tpu.pipeline_mode<synchronous>, transform_indices = @transform_3, window_bounds = array<i64: 32, 64>}, {pipeline_mode = #tpu.pipeline_mode<synchronous>, transform_indices = @transform_4, window_bounds = array<i64: 32, 1>}, {pipeline_mode = #tpu.pipeline_mode<synchronous>, transform_indices = @transform_5, window_bounds = array<i64: 16, 32>}, {pipeline_mode = #tpu.pipeline_mode<synchronous>, transform_indices = @transform_6, window_bounds = array<i64: 16, 1>}, {pipeline_mode = #tpu.pipeline_mode<synchronous>, transform_indices = @transform_7, window_bounds = array<i64: 8, 16>}, {pipeline_mode = #tpu.pipeline_mode<synchronous>, transform_indices = @transform_8, window_bounds = array<i64: 8, 1>}, {pipeline_mode = #tpu.pipeline_mode<synchronous>, transform_indices = @transform_9, window_bounds = array<i64: 4, 8>}, {pipeline_mode = #tpu.pipeline_mode<synchronous>, transform_indices = @transform_10, window_bounds = array<i64: 4, 1>}, {pipeline_mode = #tpu.pipeline_mode<synchronous>, transform_indices = @transform_11, window_bounds = array<i64: 1, 4>}, {pipeline_mode = #tpu.pipeline_mode<synchronous>, transform_indices = @transform_12, window_bounds = array<i64: 1, 1>}, {transform_indices = @transform_13, window_bounds = array<i64: 1, 128>}]} {
    %c0 = arith.constant 0 : index
    %c0_0 = arith.constant 0 : index
    %0 = vector.load %arg1[%c0, %c0_0] : memref<32x128xbf16, #tpu.memory_space<vmem>>, vector<32x128xbf16>
    %c0_1 = arith.constant 0 : index
    %c0_2 = arith.constant 0 : index
    %1 = vector.load %arg2[%c0_1, %c0_2] : memref<64x32xbf16, #tpu.memory_space<vmem>>, vector<64x32xbf16>
    %cst = arith.constant dense<0.000000e+00> : vector<64x128xf32>
    %2 = tpu.matmul %1, %0, %cst {dimension_numbers = #tpu.dot_dimension_numbers<[1], [0], [0], [1], [0, 0, 1, 1], [], []>} : vector<64x32xbf16>, vector<32x128xbf16>, vector<64x128xf32> -> vector<64x128xf32>
    %c0_3 = arith.constant 0 : index
    %c0_4 = arith.constant 0 : index
    %3 = vector.load %arg3[%c0_3, %c0_4] : memref<64x1xf32, #tpu.memory_space<vmem>>, vector<64x1xf32>
    %4 = vector.broadcast %3 : vector<64x1xf32> to vector<64x128xf32>
    %5 = arith.addf %2, %4 : vector<64x128xf32>
    %cst_5 = arith.constant 0.000000e+00 : f32
    %6 = vector.broadcast %cst_5 : f32 to vector<64x128xf32>
    %7 = arith.cmpf ogt, %5, %6 : vector<64x128xf32>
    %cst_6 = arith.constant 0.00999999977 : f32
    %8 = vector.broadcast %cst_6 : f32 to vector<64x128xf32>
    %9 = arith.mulf %8, %5 : vector<64x128xf32>
    %10 = arith.select %7, %5, %9 : vector<64x128xi1>, vector<64x128xf32>
    %11 = arith.truncf %10 : vector<64x128xf32> to vector<64x128xbf16>
    %c0_7 = arith.constant 0 : index
    %c0_8 = arith.constant 0 : index
    %12 = vector.load %arg4[%c0_7, %c0_8] : memref<32x64xbf16, #tpu.memory_space<vmem>>, vector<32x64xbf16>
    %cst_9 = arith.constant dense<0.000000e+00> : vector<32x128xf32>
    %13 = tpu.matmul %12, %11, %cst_9 {dimension_numbers = #tpu.dot_dimension_numbers<[1], [0], [0], [1], [0, 0, 1, 1], [], []>} : vector<32x64xbf16>, vector<64x128xbf16>, vector<32x128xf32> -> vector<32x128xf32>
    %c0_10 = arith.constant 0 : index
    %c0_11 = arith.constant 0 : index
    %14 = vector.load %arg5[%c0_10, %c0_11] : memref<32x1xf32, #tpu.memory_space<vmem>>, vector<32x1xf32>
    %15 = vector.broadcast %14 : vector<32x1xf32> to vector<32x128xf32>
    %16 = arith.addf %13, %15 : vector<32x128xf32>
    %cst_12 = arith.constant 0.000000e+00 : f32
    %17 = vector.broadcast %cst_12 : f32 to vector<32x128xf32>
    %18 = arith.cmpf ogt, %16, %17 : vector<32x128xf32>
    %cst_13 = arith.constant 0.00999999977 : f32
    %19 = vector.broadcast %cst_13 : f32 to vector<32x128xf32>
    %20 = arith.mulf %19, %16 : vector<32x128xf32>
    %21 = arith.select %18, %16, %20 : vector<32x128xi1>, vector<32x128xf32>
    %22 = arith.truncf %21 : vector<32x128xf32> to vector<32x128xbf16>
    %c0_14 = arith.constant 0 : index
    %c0_15 = arith.constant 0 : index
    %23 = vector.load %arg6[%c0_14, %c0_15] : memref<16x32xbf16, #tpu.memory_space<vmem>>, vector<16x32xbf16>
    %cst_16 = arith.constant dense<0.000000e+00> : vector<16x128xf32>
    %24 = tpu.matmul %23, %22, %cst_16 {dimension_numbers = #tpu.dot_dimension_numbers<[1], [0], [0], [1], [0, 0, 1, 1], [], []>} : vector<16x32xbf16>, vector<32x128xbf16>, vector<16x128xf32> -> vector<16x128xf32>
    %c0_17 = arith.constant 0 : index
    %c0_18 = arith.constant 0 : index
    %25 = vector.load %arg7[%c0_17, %c0_18] : memref<16x1xf32, #tpu.memory_space<vmem>>, vector<16x1xf32>
    %26 = vector.broadcast %25 : vector<16x1xf32> to vector<16x128xf32>
    %27 = arith.addf %24, %26 : vector<16x128xf32>
    %cst_19 = arith.constant 0.000000e+00 : f32
    %28 = vector.broadcast %cst_19 : f32 to vector<16x128xf32>
    %29 = arith.cmpf ogt, %27, %28 : vector<16x128xf32>
    %cst_20 = arith.constant 0.00999999977 : f32
    %30 = vector.broadcast %cst_20 : f32 to vector<16x128xf32>
    %31 = arith.mulf %30, %27 : vector<16x128xf32>
    %32 = arith.select %29, %27, %31 : vector<16x128xi1>, vector<16x128xf32>
    %33 = arith.truncf %32 : vector<16x128xf32> to vector<16x128xbf16>
    %c0_21 = arith.constant 0 : index
    %c0_22 = arith.constant 0 : index
    %34 = vector.load %arg8[%c0_21, %c0_22] : memref<8x16xbf16, #tpu.memory_space<vmem>>, vector<8x16xbf16>
    %cst_23 = arith.constant dense<0.000000e+00> : vector<8x128xf32>
    %35 = tpu.matmul %34, %33, %cst_23 {dimension_numbers = #tpu.dot_dimension_numbers<[1], [0], [0], [1], [0, 0, 1, 1], [], []>} : vector<8x16xbf16>, vector<16x128xbf16>, vector<8x128xf32> -> vector<8x128xf32>
    %c0_24 = arith.constant 0 : index
    %c0_25 = arith.constant 0 : index
    %36 = vector.load %arg9[%c0_24, %c0_25] : memref<8x1xf32, #tpu.memory_space<vmem>>, vector<8x1xf32>
    %37 = vector.broadcast %36 : vector<8x1xf32> to vector<8x128xf32>
    %38 = arith.addf %35, %37 : vector<8x128xf32>
    %cst_26 = arith.constant 0.000000e+00 : f32
    %39 = vector.broadcast %cst_26 : f32 to vector<8x128xf32>
    %40 = arith.cmpf ogt, %38, %39 : vector<8x128xf32>
    %cst_27 = arith.constant 0.00999999977 : f32
    %41 = vector.broadcast %cst_27 : f32 to vector<8x128xf32>
    %42 = arith.mulf %41, %38 : vector<8x128xf32>
    %43 = arith.select %40, %38, %42 : vector<8x128xi1>, vector<8x128xf32>
    %44 = arith.truncf %43 : vector<8x128xf32> to vector<8x128xbf16>
    %c0_28 = arith.constant 0 : index
    %c0_29 = arith.constant 0 : index
    %45 = vector.load %arg10[%c0_28, %c0_29] : memref<4x8xbf16, #tpu.memory_space<vmem>>, vector<4x8xbf16>
    %cst_30 = arith.constant dense<0.000000e+00> : vector<4x128xf32>
    %46 = tpu.matmul %45, %44, %cst_30 {dimension_numbers = #tpu.dot_dimension_numbers<[1], [0], [0], [1], [0, 0, 1, 1], [], []>} : vector<4x8xbf16>, vector<8x128xbf16>, vector<4x128xf32> -> vector<4x128xf32>
    %c0_31 = arith.constant 0 : index
    %c0_32 = arith.constant 0 : index
    %47 = vector.load %arg11[%c0_31, %c0_32] : memref<4x1xf32, #tpu.memory_space<vmem>>, vector<4x1xf32>
    %48 = vector.broadcast %47 : vector<4x1xf32> to vector<4x128xf32>
    %49 = arith.addf %46, %48 : vector<4x128xf32>
    %cst_33 = arith.constant 0.000000e+00 : f32
    %50 = vector.broadcast %cst_33 : f32 to vector<4x128xf32>
    %51 = arith.cmpf ogt, %49, %50 : vector<4x128xf32>
    %cst_34 = arith.constant 0.00999999977 : f32
    %52 = vector.broadcast %cst_34 : f32 to vector<4x128xf32>
    %53 = arith.mulf %52, %49 : vector<4x128xf32>
    %54 = arith.select %51, %49, %53 : vector<4x128xi1>, vector<4x128xf32>
    %55 = arith.truncf %54 : vector<4x128xf32> to vector<4x128xbf16>
    %c0_35 = arith.constant 0 : index
    %c0_36 = arith.constant 0 : index
    %56 = vector.load %arg12[%c0_35, %c0_36] : memref<1x4xbf16, #tpu.memory_space<vmem>>, vector<1x4xbf16>
    %cst_37 = arith.constant dense<0.000000e+00> : vector<1x128xf32>
    %57 = tpu.matmul %56, %55, %cst_37 {dimension_numbers = #tpu.dot_dimension_numbers<[1], [0], [0], [1], [0, 0, 1, 1], [], []>} : vector<1x4xbf16>, vector<4x128xbf16>, vector<1x128xf32> -> vector<1x128xf32>
    %c0_38 = arith.constant 0 : index
    %c0_39 = arith.constant 0 : index
    %58 = vector.load %arg13[%c0_38, %c0_39] : memref<1x1xf32, #tpu.memory_space<vmem>>, vector<1x1xf32>
    %59 = vector.broadcast %58 : vector<1x1xf32> to vector<1x128xf32>
    %60 = arith.addf %57, %59 : vector<1x128xf32>
    %cst_40 = arith.constant 0.000000e+00 : f32
    %61 = vector.broadcast %cst_40 : f32 to vector<1x128xf32>
    %62 = arith.subf %61, %60 : vector<1x128xf32>
    %63 = math.exp %62 : vector<1x128xf32>
    %cst_41 = arith.constant 1.000000e+00 : f32
    %64 = vector.broadcast %cst_41 : f32 to vector<1x128xf32>
    %65 = arith.addf %64, %63 : vector<1x128xf32>
    %66 = tpu.reciprocal %65 {approx = true} : vector<1x128xf32> -> vector<1x128xf32>
    %c0_42 = arith.constant 0 : index
    %c0_43 = arith.constant 0 : index
    %67 = vector.load %arg14[%c0_42, %c0_43] : memref<1x128xf32, #tpu.memory_space<vmem>>, vector<1x128xf32>
    tpu.vector_store %arg14[%c0_42, %c0_43], %66 {strides = array<i32>} : memref<1x128xf32, #tpu.memory_space<vmem>>, vector<1x128xf32>,
    return
  }
  func.func @transform_0(%arg0: i32) -> (i32, i32) {
    %c0_i32 = arith.constant 0 : i32
    %c0_i32_0 = arith.constant 0 : i32
    return %c0_i32, %arg0 : i32, i32
  }
  func.func @transform_1(%arg0: i32) -> (i32, i32) {
    %c0_i32 = arith.constant 0 : i32
    %c0_i32_0 = arith.constant 0 : i32
    %c0_i32_1 = arith.constant 0 : i32
    return %c0_i32, %c0_i32_0 : i32, i32
  }
  func.func @transform_2(%arg0: i32) -> (i32, i32) {
    %c0_i32 = arith.constant 0 : i32
    %c0_i32_0 = arith.constant 0 : i32
    %c0_i32_1 = arith.constant 0 : i32
    return %c0_i32, %c0_i32_0 : i32, i32
  }
  func.func @transform_3(%arg0: i32) -> (i32, i32) {
    %c0_i32 = arith.constant 0 : i32
    %c0_i32_0 = arith.constant 0 : i32
    %c0_i32_1 = arith.constant 0 : i32
    return %c0_i32, %c0_i32_0 : i32, i32
  }
  func.func @transform_4(%arg0: i32) -> (i32, i32) {
    %c0_i32 = arith.constant 0 : i32
    %c0_i32_0 = arith.constant 0 : i32
    %c0_i32_1 = arith.constant 0 : i32
    return %c0_i32, %c0_i32_0 : i32, i32
  }
  func.func @transform_5(%arg0: i32) -> (i32, i32) {
    %c0_i32 = arith.constant 0 : i32
    %c0_i32_0 = arith.constant 0 : i32
    %c0_i32_1 = arith.constant 0 : i32
    return %c0_i32, %c0_i32_0 : i32, i32
  }
  func.func @transform_6(%arg0: i32) -> (i32, i32) {
    %c0_i32 = arith.constant 0 : i32
    %c0_i32_0 = arith.constant 0 : i32
    %c0_i32_1 = arith.constant 0 : i32
    return %c0_i32, %c0_i32_0 : i32, i32
  }
  func.func @transform_7(%arg0: i32) -> (i32, i32) {
    %c0_i32 = arith.constant 0 : i32
    %c0_i32_0 = arith.constant 0 : i32
    %c0_i32_1 = arith.constant 0 : i32
    return %c0_i32, %c0_i32_0 : i32, i32
  }
  func.func @transform_8(%arg0: i32) -> (i32, i32) {
    %c0_i32 = arith.constant 0 : i32
    %c0_i32_0 = arith.constant 0 : i32
    %c0_i32_1 = arith.constant 0 : i32
    return %c0_i32, %c0_i32_0 : i32, i32
  }
  func.func @transform_9(%arg0: i32) -> (i32, i32) {
    %c0_i32 = arith.constant 0 : i32
    %c0_i32_0 = arith.constant 0 : i32
    %c0_i32_1 = arith.constant 0 : i32
    return %c0_i32, %c0_i32_0 : i32, i32
  }
  func.func @transform_10(%arg0: i32) -> (i32, i32) {
    %c0_i32 = arith.constant 0 : i32
    %c0_i32_0 = arith.constant 0 : i32
    %c0_i32_1 = arith.constant 0 : i32
    return %c0_i32, %c0_i32_0 : i32, i32
  }
  func.func @transform_11(%arg0: i32) -> (i32, i32) {
    %c0_i32 = arith.constant 0 : i32
    %c0_i32_0 = arith.constant 0 : i32
    %c0_i32_1 = arith.constant 0 : i32
    return %c0_i32, %c0_i32_0 : i32, i32
  }
  func.func @transform_12(%arg0: i32) -> (i32, i32) {
    %c0_i32 = arith.constant 0 : i32
    %c0_i32_0 = arith.constant 0 : i32
    %c0_i32_1 = arith.constant 0 : i32
    return %c0_i32, %c0_i32_0 : i32, i32
  }
  func.func @transform_13(%arg0: i32) -> (i32, i32) {
    %c0_i32 = arith.constant 0 : i32
    %c0_i32_0 = arith.constant 0 : i32
    return %c0_i32, %arg0 : i32, i32
  }
}

</mosaic_0001>

<llo_original>
// kernel: discriminator_forward.1
$region0: #{discriminator_forward.1}
  #allocation0 [shape = 'u32[]', space=smem, size = 0x4, offset = 0x4, fixed_abs, tag = 'smem constant byte address 0x4 - core index']
  #allocation1 [shape = 'u32[144,128]{1,0:T(1,128)}', space=vmem, size = 0x12000, scoped, tag = 'internal scratch']
  #allocation2 [shape = 'f32[1,1]{1,0:T(1,128)S(1)}', space=vmem, size = 0x200, scoped, tag = 'scoped memory for discriminator_forward.1']
  %s0 = inlined_call_operand.vmem [shape: bf16[32,128], index: 0, kind: input, shape index: {}]
  %s1 = inlined_call_operand.vmem [shape: bf16[64,32], index: 1, kind: input, shape index: {}]
  %s2 = inlined_call_operand.vmem [shape: f32[64,1], index: 2, kind: input, shape index: {}]
  %s3 = inlined_call_operand.vmem [shape: bf16[32,64], index: 3, kind: input, shape index: {}]
  %s4 = inlined_call_operand.vmem [shape: f32[32,1], index: 4, kind: input, shape index: {}]
  %s5 = inlined_call_operand.vmem [shape: bf16[16,32], index: 5, kind: input, shape index: {}]
  %s6 = inlined_call_operand.vmem [shape: f32[16,1], index: 6, kind: input, shape index: {}]
  %s7 = inlined_call_operand.vmem [shape: bf16[8,16], index: 7, kind: input, shape index: {}]
  %s8 = inlined_call_operand.vmem [shape: f32[8,1], index: 8, kind: input, shape index: {}]
  %s9 = inlined_call_operand.vmem [shape: bf16[4,8], index: 9, kind: input, shape index: {}]
  %s10 = inlined_call_operand.vmem [shape: f32[4,1], index: 10, kind: input, shape index: {}]
  %s11 = inlined_call_operand.vmem [shape: bf16[1,4], index: 11, kind: input, shape index: {}]
  %s12 = inlined_call_operand.<no memory space> [shape: f32[1,1], index: 12, kind: input, shape index: {}]
  %s13 = inlined_call_operand.vmem [shape: f32[1,128], index: 13, kind: output, shape index: {}]
  %s14 = sld [smem:[#allocation0]]
  $region62: #{discriminator_forward.1} parent=0
    _
  %s16 = ssub.s32 1, %s14
  %s17 = scalar_select 0, %s16, %s14
  %v18 = vstv %s12
  %19 = vst [vmem:[#allocation2] sm:$0x1] %v18
  // Predicated region
  $region2: #{discriminator_forward.1} parent=0 // pred_check
    _
  $region3: #{discriminator_forward.1} parent=0 // pred_check_branch
    %21 = sbr.rel (0) target = $region5
  $region4: #{discriminator_forward.1} parent=0 // pred_region
    _
  $region5: #{discriminator_forward.1} parent=0 // pred_fallthru
    _
  // Predicated region
  $region6: #{discriminator_forward.1} parent=0 // pred_check
    _
  $region7: #{discriminator_forward.1} parent=0 // pred_check_branch
    %23 = sbr.rel (0) target = $region9
  $region8: #{discriminator_forward.1} parent=0 // pred_region
    _
  $region9: #{discriminator_forward.1} parent=0 // pred_fallthru
    _
  // Predicated region
  $region10: #{discriminator_forward.1} parent=0 // pred_check
    _
  $region11: #{discriminator_forward.1} parent=0 // pred_check_branch
    %25 = sbr.rel (0) target = $region13
  $region12: #{discriminator_forward.1} parent=0 // pred_region
    _
  $region13: #{discriminator_forward.1} parent=0 // pred_fallthru
    _
  // Predicated region
  $region14: #{discriminator_forward.1} parent=0 // pred_check
    _
  $region15: #{discriminator_forward.1} parent=0 // pred_check_branch
    %27 = sbr.rel (0) target = $region17
  $region16: #{discriminator_forward.1} parent=0 // pred_region
    _
  $region17: #{discriminator_forward.1} parent=0 // pred_fallthru
    _
  // Predicated region
  $region18: #{discriminator_forward.1} parent=0 // pred_check
    _
  $region19: #{discriminator_forward.1} parent=0 // pred_check_branch
    %29 = sbr.rel (0) target = $region21
  $region20: #{discriminator_forward.1} parent=0 // pred_region
    _
  $region21: #{discriminator_forward.1} parent=0 // pred_fallthru
    _
  // Predicated region
  $region22: #{discriminator_forward.1} parent=0 // pred_check
    _
  $region23: #{discriminator_forward.1} parent=0 // pred_check_branch
    %31 = sbr.rel (0) target = $region25
  $region24: #{discriminator_forward.1} parent=0 // pred_region
    _
  $region25: #{discriminator_forward.1} parent=0 // pred_fallthru
    _
  // Predicated region
  $region26: #{discriminator_forward.1} parent=0 // pred_check
    _
  $region27: #{discriminator_forward.1} parent=0 // pred_check_branch
    %33 = sbr.rel (0) target = $region29
  $region28: #{discriminator_forward.1} parent=0 // pred_region
    _
  $region29: #{discriminator_forward.1} parent=0 // pred_fallthru
    _
  // Predicated region
  $region30: #{discriminator_forward.1} parent=0 // pred_check
    _
  $region31: #{discriminator_forward.1} parent=0 // pred_check_branch
    %35 = sbr.rel (0) target = $region33
  $region32: #{discriminator_forward.1} parent=0 // pred_region
    _
  $region33: #{discriminator_forward.1} parent=0 // pred_fallthru
    _
  // Predicated region
  $region34: #{discriminator_forward.1} parent=0 // pred_check
    _
  $region35: #{discriminator_forward.1} parent=0 // pred_check_branch
    %37 = sbr.rel (0) target = $region37
  $region36: #{discriminator_forward.1} parent=0 // pred_region
    _
  $region37: #{discriminator_forward.1} parent=0 // pred_fallthru
    _
  // Predicated region
  $region38: #{discriminator_forward.1} parent=0 // pred_check
    _
  $region39: #{discriminator_forward.1} parent=0 // pred_check_branch
    %39 = sbr.rel (0) target = $region41
  $region40: #{discriminator_forward.1} parent=0 // pred_region
    _
  $region41: #{discriminator_forward.1} parent=0 // pred_fallthru
    _
  // Predicated region
  $region42: #{discriminator_forward.1} parent=0 // pred_check
    _
  $region43: #{discriminator_forward.1} parent=0 // pred_check_branch
    %41 = sbr.rel (0) target = $region45
  $region44: #{discriminator_forward.1} parent=0 // pred_region
    _
  $region45: #{discriminator_forward.1} parent=0 // pred_fallthru
    _
  // Predicated region
  $region46: #{discriminator_forward.1} parent=0 // pred_check
    _
  $region47: #{discriminator_forward.1} parent=0 // pred_check_branch
    %43 = sbr.rel (0) target = $region49
  $region48: #{discriminator_forward.1} parent=0 // pred_region
    _
  $region49: #{discriminator_forward.1} parent=0 // pred_fallthru
    _
  // Predicated region
  $region50: #{discriminator_forward.1} parent=0 // pred_check
    _
  $region51: #{discriminator_forward.1} parent=0 // pred_check_branch
    %45 = sbr.rel (0) target = $region53
  $region52: #{discriminator_forward.1} parent=0 // pred_region
    _
  $region53: #{discriminator_forward.1} parent=0 // pred_fallthru
    _
  %v47 = vld [vmem:[%s0] sm:$0xf]
  %v48 = vld [vmem:[%s0 + $0x4] sm:$0xf]
  %v49 = vld [vmem:[%s0 + $0x8] sm:$0xf]
  %v50 = vld [vmem:[%s0 + $0xc] sm:$0xf]
  %v51 = vld [vmem:[%s1] sm:$0xf]
  %v52 = vld [vmem:[%s1 + $0x4] sm:$0xf]
  %v53 = vld [vmem:[%s1 + $0x8] sm:$0xf]
  %v54 = vld [vmem:[%s1 + $0xc] sm:$0xf]
  %v55 = vld [vmem:[%s1 + $0x10] sm:$0xf]
  %v56 = vld [vmem:[%s1 + $0x14] sm:$0xf]
  %v57 = vld [vmem:[%s1 + $0x18] sm:$0xf]
  %v58 = vld [vmem:[%s1 + $0x1c] sm:$0xf]
  %v59 = vld [vmem:[%s2] sm:$0xff]
  %v60 = vld [vmem:[%s2 + $0x8] sm:$0xff]
  %v61 = vld [vmem:[%s2 + $0x10] sm:$0xff]
  %v62 = vld [vmem:[%s2 + $0x18] sm:$0xff]
  %v63 = vld [vmem:[%s2 + $0x20] sm:$0xff]
  %v64 = vld [vmem:[%s2 + $0x28] sm:$0xff]
  %v65 = vld [vmem:[%s2 + $0x30] sm:$0xff]
  %v66 = vld [vmem:[%s2 + $0x38] sm:$0xff]
  %68 = vset.pattern.permute.xlu0 0
  %69 = vperm.xlu0 %68, %v59
  %v70 = vpop.permute.xlu0 %69
  %73 = vset.pattern.permute.xlu0 0
  %74 = vperm.xlu0 %73, %v60
  %v75 = vpop.permute.xlu0 %74
  %78 = vset.pattern.permute.xlu0 0
  %79 = vperm.xlu0 %78, %v61
  %v80 = vpop.permute.xlu0 %79
  %83 = vset.pattern.permute.xlu0 0
  %84 = vperm.xlu0 %83, %v62
  %v85 = vpop.permute.xlu0 %84
  %88 = vset.pattern.permute.xlu0 0
  %89 = vperm.xlu0 %88, %v63
  %v90 = vpop.permute.xlu0 %89
  %93 = vset.pattern.permute.xlu0 0
  %94 = vperm.xlu0 %93, %v64
  %v95 = vpop.permute.xlu0 %94
  %98 = vset.pattern.permute.xlu0 0
  %99 = vperm.xlu0 %98, %v65
  %v100 = vpop.permute.xlu0 %99
  %103 = vset.pattern.permute.xlu0 0
  %104 = vperm.xlu0 %103, %v66
  %v105 = vpop.permute.xlu0 %104
  %v115 = vunpack.c.l.b16 %v51
  %v116 = vunpack.c.l.b16 %v52
  %v117 = vunpack.c.l.b16 %v53
  %v118 = vunpack.c.l.b16 %v54
  %v119 = vunpack.c.l.b16 %v55
  %v120 = vunpack.c.l.b16 %v56
  %v121 = vunpack.c.l.b16 %v57
  %v122 = vunpack.c.l.b16 %v58
  %v123 = vpack.c.b16 %v116, %v115
  %v124 = vpack.c.b16 %v118, %v117
  %v125 = vpack.c.b16 %v120, %v119
  %v126 = vpack.c.b16 %v122, %v121
  %v131 = vunpack.c.l.b16 %v47
  %v132 = vunpack.c.l.b16 %v48
  %v133 = vunpack.c.l.b16 %v49
  %v134 = vunpack.c.l.b16 %v50
  %v135 = vpack.c.b16 %v132, %v131
  %v136 = vpack.c.b16 %v134, %v133
  %vm139 = vcmask 261120
  %v141 = vsel %vm139, %v123, 0
  %v144 = vsel %vm139, %v124, 0
  %v147 = vsel %vm139, %v125, 0
  %v150 = vsel %vm139, %v126, 0
  %152 = vmatprep.subr.bf16.mxu0 0
  %153 = vmatpush1.bf16.msra.mxu0 0
  %154 = vmatprep.subr.bf16.mxu0 0
  %155 = vmatpush1.bf16.msra.mxu0 0
  %156 = vmatprep.subr.bf16.mxu0 0
  %157 = vmatpush1.bf16.msra.mxu0 0
  %158 = vmatprep.subr.bf16.mxu0 0
  %159 = vmatpush1.bf16.msra.mxu0 0
  %160 = vmatprep.subr.bf16.mxu0 0
  %161 = vmatpush1.bf16.msra.mxu0 0
  %162 = vmatprep.subr.bf16.mxu0 0
  %163 = vmatpush1.bf16.msra.mxu0 0
  %164 = vmatprep.subr.bf16.mxu0 0
  %165 = vmatpush1.bf16.msra.mxu0 %v136
  %166 = vmatprep.subr.bf16.mxu0 0
  %167 = vmatpush1.bf16.msra.mxu0 %v135
  %168 = vmatprep.subr.bf16.mxu0 0
  %169 = vmatpush2.bf16.msra.mxu0 0
  %170 = vmatprep.subr.bf16.mxu0 0
  %171 = vmatpush2.bf16.msra.mxu0 0
  %172 = vmatprep.subr.bf16.mxu0 0
  %173 = vmatpush2.bf16.msra.mxu0 0
  %174 = vmatprep.subr.bf16.mxu0 0
  %175 = vmatpush2.bf16.msra.mxu0 0
  %176 = vmatprep.subr.bf16.mxu0 0
  %177 = vmatpush2.bf16.msra.mxu0 0
  %178 = vmatprep.subr.bf16.mxu0 0
  %179 = vmatpush2.bf16.msra.mxu0 0
  %180 = vmatprep.subr.bf16.mxu0 0
  %181 = vmatpush2.bf16.msra.mxu0 0
  %182 = vmatprep.subr.bf16.mxu0 0
  %183 = vmatpush2.bf16.msra.mxu0 0
  %184 = vmatprep.mubr.bf16.mxu0 0
  %185 = vmatmul.mubr.bf16.gmra.mxu0 %v141
  %v186 = vpop.f32.mrf.mxu0
  %v187 = vadd.f32 %v70, %v186
  %v188 = vpop.f32.mrf.mxu0
  %v189 = vpop.f32.mrf.mxu0
  %v190 = vadd.f32 %v75, %v189
  %v191 = vpop.f32.mrf.mxu0
  %192 = vmatprep.mubr.bf16.mxu0 0
  %193 = vmatmul.mubr.bf16.gmra.mxu0 %v144
  %v194 = vpop.f32.mrf.mxu0
  %v195 = vadd.f32 %v80, %v194
  %v196 = vpop.f32.mrf.mxu0
  %v197 = vpop.f32.mrf.mxu0
  %v198 = vadd.f32 %v85, %v197
  %v199 = vpop.f32.mrf.mxu0
  %200 = vmatprep.mubr.bf16.mxu0 0
  %201 = vmatmul.mubr.bf16.gmra.mxu0 %v147
  %v202 = vpop.f32.mrf.mxu0
  %v203 = vadd.f32 %v90, %v202
  %v204 = vpop.f32.mrf.mxu0
  %v205 = vpop.f32.mrf.mxu0
  %v206 = vadd.f32 %v95, %v205
  %v207 = vpop.f32.mrf.mxu0
  %208 = vmatprep.mubr.bf16.mxu0 0
  %209 = vmatmul.mubr.bf16.gmra.mxu0 %v150
  %v210 = vpop.f32.mrf.mxu0
  %v211 = vadd.f32 %v100, %v210
  %v212 = vpop.f32.mrf.mxu0
  %v213 = vpop.f32.mrf.mxu0
  %v214 = vadd.f32 %v105, %v213
  %v215 = vpop.f32.mrf.mxu0
  %216 = vdwg.mxu0
  %vm217 = vcmp.gt.f32.partialorder %v187, 0.0
  %vm218 = vcmp.gt.f32.partialorder %v190, 0.0
  %vm219 = vcmp.gt.f32.partialorder %v195, 0.0
  %vm220 = vcmp.gt.f32.partialorder %v198, 0.0
  %vm221 = vcmp.gt.f32.partialorder %v203, 0.0
  %vm222 = vcmp.gt.f32.partialorder %v206, 0.0
  %vm223 = vcmp.gt.f32.partialorder %v211, 0.0
  %vm224 = vcmp.gt.f32.partialorder %v214, 0.0
  %v225 = vmul.f32 %v187, 0.01
  %v226 = vmul.f32 %v190, 0.01
  %v227 = vmul.f32 %v195, 0.01
  %v228 = vmul.f32 %v198, 0.01
  %v229 = vmul.f32 %v203, 0.01
  %v230 = vmul.f32 %v206, 0.01
  %v231 = vmul.f32 %v211, 0.01
  %v232 = vmul.f32 %v214, 0.01
  %v233 = vsel %vm217, %v187, %v225
  %v234 = vsel %vm218, %v190, %v226
  %v235 = vsel %vm219, %v195, %v227
  %v236 = vsel %vm220, %v198, %v228
  %v237 = vsel %vm221, %v203, %v229
  %v238 = vsel %vm222, %v206, %v230
  %v239 = vsel %vm223, %v211, %v231
  %v240 = vsel %vm224, %v214, %v232
  %v241 = vpack.c.bf16 %v234, %v233
  %v242 = vpack.c.bf16 %v236, %v235
  %v243 = vpack.c.bf16 %v238, %v237
  %v244 = vpack.c.bf16 %v240, %v239
  %v245 = vld [vmem:[%s3] sm:$0xf]
  %v246 = vld [vmem:[%s3 + $0x4] sm:$0xf]
  %v247 = vld [vmem:[%s3 + $0x8] sm:$0xf]
  %v248 = vld [vmem:[%s3 + $0xc] sm:$0xf]
  %v249 = vld [vmem:[%s4] sm:$0xff]
  %v250 = vld [vmem:[%s4 + $0x8] sm:$0xff]
  %v251 = vld [vmem:[%s4 + $0x10] sm:$0xff]
  %v252 = vld [vmem:[%s4 + $0x18] sm:$0xff]
  %254 = vset.pattern.permute.xlu0 0
  %255 = vperm.xlu0 %254, %v249
  %v256 = vpop.permute.xlu0 %255
  %259 = vset.pattern.permute.xlu0 0
  %260 = vperm.xlu0 %259, %v250
  %v261 = vpop.permute.xlu0 %260
  %264 = vset.pattern.permute.xlu0 0
  %265 = vperm.xlu0 %264, %v251
  %v266 = vpop.permute.xlu0 %265
  %269 = vset.pattern.permute.xlu0 0
  %270 = vperm.xlu0 %269, %v252
  %v271 = vpop.permute.xlu0 %270
  %v277 = vunpack.c.l.b16 %v245
  %v278 = vunpack.c.l.b16 %v246
  %v279 = vunpack.c.l.b16 %v247
  %v280 = vunpack.c.l.b16 %v248
  %v281 = vpack.c.b16 %v278, %v277
  %v282 = vpack.c.b16 %v280, %v279
  %vm283 = vcmask 523264
  %v285 = vsel %vm283, %v281, 0
  %v288 = vsel %vm283, %v282, 0
  %290 = vmatprep.subr.bf16.mxu0 0
  %291 = vmatpush1.bf16.msra.mxu0 0
  %292 = vmatprep.subr.bf16.mxu0 0
  %293 = vmatpush1.bf16.msra.mxu0 0
  %294 = vmatprep.subr.bf16.mxu0 0
  %295 = vmatpush1.bf16.msra.mxu0 0
  %296 = vmatprep.subr.bf16.mxu0 0
  %297 = vmatpush1.bf16.msra.mxu0 0
  %298 = vmatprep.subr.bf16.mxu0 0
  %299 = vmatpush1.bf16.msra.mxu0 %v244
  %300 = vmatprep.subr.bf16.mxu0 0
  %301 = vmatpush1.bf16.msra.mxu0 %v243
  %302 = vmatprep.subr.bf16.mxu0 0
  %303 = vmatpush1.bf16.msra.mxu0 %v242
  %304 = vmatprep.subr.bf16.mxu0 0
  %305 = vmatpush1.bf16.msra.mxu0 %v241
  %306 = vmatprep.subr.bf16.mxu0 0
  %307 = vmatpush2.bf16.msra.mxu0 0
  %308 = vmatprep.subr.bf16.mxu0 0
  %309 = vmatpush2.bf16.msra.mxu0 0
  %310 = vmatprep.subr.bf16.mxu0 0
  %311 = vmatpush2.bf16.msra.mxu0 0
  %312 = vmatprep.subr.bf16.mxu0 0
  %313 = vmatpush2.bf16.msra.mxu0 0
  %314 = vmatprep.subr.bf16.mxu0 0
  %315 = vmatpush2.bf16.msra.mxu0 0
  %316 = vmatprep.subr.bf16.mxu0 0
  %317 = vmatpush2.bf16.msra.mxu0 0
  %318 = vmatprep.subr.bf16.mxu0 0
  %319 = vmatpush2.bf16.msra.mxu0 0
  %320 = vmatprep.subr.bf16.mxu0 0
  %321 = vmatpush2.bf16.msra.mxu0 0
  %322 = vmatprep.mubr.bf16.mxu0 0
  %323 = vmatmul.mubr.bf16.gmra.mxu0 %v285
  %v324 = vpop.f32.mrf.mxu0
  %v325 = vadd.f32 %v256, %v324
  %v326 = vpop.f32.mrf.mxu0
  %v327 = vpop.f32.mrf.mxu0
  %v328 = vadd.f32 %v261, %v327
  %v329 = vpop.f32.mrf.mxu0
  %330 = vmatprep.mubr.bf16.mxu0 0
  %331 = vmatmul.mubr.bf16.gmra.mxu0 %v288
  %v332 = vpop.f32.mrf.mxu0
  %v333 = vadd.f32 %v266, %v332
  %v334 = vpop.f32.mrf.mxu0
  %v335 = vpop.f32.mrf.mxu0
  %v336 = vadd.f32 %v271, %v335
  %v337 = vpop.f32.mrf.mxu0
  %338 = vdwg.mxu0
  %vm339 = vcmp.gt.f32.partialorder %v325, 0.0
  %vm340 = vcmp.gt.f32.partialorder %v328, 0.0
  %vm341 = vcmp.gt.f32.partialorder %v333, 0.0
  %vm342 = vcmp.gt.f32.partialorder %v336, 0.0
  %v343 = vmul.f32 %v325, 0.01
  %v344 = vmul.f32 %v328, 0.01
  %v345 = vmul.f32 %v333, 0.01
  %v346 = vmul.f32 %v336, 0.01
  %v347 = vsel %vm339, %v325, %v343
  %v348 = vsel %vm340, %v328, %v344
  %v349 = vsel %vm341, %v333, %v345
  %v350 = vsel %vm342, %v336, %v346
  %v351 = vpack.c.bf16 %v348, %v347
  %v352 = vpack.c.bf16 %v350, %v349
  %v353 = vld [vmem:[%s5] sm:$0xf]
  %v354 = vld [vmem:[%s5 + $0x4] sm:$0xf]
  %v355 = vld [vmem:[%s6] sm:$0xff]
  %v356 = vld [vmem:[%s6 + $0x8] sm:$0xff]
  %358 = vset.pattern.permute.xlu0 0
  %359 = vperm.xlu0 %358, %v355
  %v360 = vpop.permute.xlu0 %359
  %363 = vset.pattern.permute.xlu0 0
  %364 = vperm.xlu0 %363, %v356
  %v365 = vpop.permute.xlu0 %364
  %v369 = vunpack.c.l.b16 %v353
  %v370 = vunpack.c.l.b16 %v354
  %v371 = vpack.c.b16 %v370, %v369
  %v373 = vsel %vm139, %v371, 0
  %375 = vmatprep.subr.bf16.mxu0 0
  %376 = vmatpush1.bf16.msra.mxu0 0
  %377 = vmatprep.subr.bf16.mxu0 0
  %378 = vmatpush1.bf16.msra.mxu0 0
  %379 = vmatprep.subr.bf16.mxu0 0
  %380 = vmatpush1.bf16.msra.mxu0 0
  %381 = vmatprep.subr.bf16.mxu0 0
  %382 = vmatpush1.bf16.msra.mxu0 0
  %383 = vmatprep.subr.bf16.mxu0 0
  %384 = vmatpush1.bf16.msra.mxu0 0
  %385 = vmatprep.subr.bf16.mxu0 0
  %386 = vmatpush1.bf16.msra.mxu0 0
  %387 = vmatprep.subr.bf16.mxu0 0
  %388 = vmatpush1.bf16.msra.mxu0 %v352
  %389 = vmatprep.subr.bf16.mxu0 0
  %390 = vmatpush1.bf16.msra.mxu0 %v351
  %391 = vmatprep.subr.bf16.mxu0 0
  %392 = vmatpush2.bf16.msra.mxu0 0
  %393 = vmatprep.subr.bf16.mxu0 0
  %394 = vmatpush2.bf16.msra.mxu0 0
  %395 = vmatprep.subr.bf16.mxu0 0
  %396 = vmatpush2.bf16.msra.mxu0 0
  %397 = vmatprep.subr.bf16.mxu0 0
  %398 = vmatpush2.bf16.msra.mxu0 0
  %399 = vmatprep.subr.bf16.mxu0 0
  %400 = vmatpush2.bf16.msra.mxu0 0
  %401 = vmatprep.subr.bf16.mxu0 0
  %402 = vmatpush2.bf16.msra.mxu0 0
  %403 = vmatprep.subr.bf16.mxu0 0
  %404 = vmatpush2.bf16.msra.mxu0 0
  %405 = vmatprep.subr.bf16.mxu0 0
  %406 = vmatpush2.bf16.msra.mxu0 0
  %407 = vmatprep.mubr.bf16.mxu0 0
  %408 = vmatmul.mubr.bf16.gmra.mxu0 %v373
  %v409 = vpop.f32.mrf.mxu0
  %v410 = vadd.f32 %v360, %v409
  %v411 = vpop.f32.mrf.mxu0
  %v412 = vpop.f32.mrf.mxu0
  %v413 = vadd.f32 %v365, %v412
  %v414 = vpop.f32.mrf.mxu0
  %415 = vdwg.mxu0
  %vm416 = vcmp.gt.f32.partialorder %v410, 0.0
  %vm417 = vcmp.gt.f32.partialorder %v413, 0.0
  %v418 = vmul.f32 %v410, 0.01
  %v419 = vmul.f32 %v413, 0.01
  %v420 = vsel %vm416, %v410, %v418
  %v421 = vsel %vm417, %v413, %v419
  %v422 = vpack.c.bf16 %v421, %v420
  %v423 = vld [vmem:[%s7] sm:$0xf]
  %v424 = vld [vmem:[%s8] sm:$0xff]
  %426 = vset.pattern.permute.xlu0 0
  %427 = vperm.xlu0 %426, %v424
  %v428 = vpop.permute.xlu0 %427
  %vm430 = vcmask 130048
  %v432 = vsel %vm430, %v423, 0
  %434 = vmatprep.subr.bf16.mxu0 0
  %435 = vmatpush1.bf16.msra.mxu0 0
  %436 = vmatprep.subr.bf16.mxu0 0
  %437 = vmatpush1.bf16.msra.mxu0 0
  %438 = vmatprep.subr.bf16.mxu0 0
  %439 = vmatpush1.bf16.msra.mxu0 0
  %440 = vmatprep.subr.bf16.mxu0 0
  %441 = vmatpush1.bf16.msra.mxu0 0
  %442 = vmatprep.subr.bf16.mxu0 0
  %443 = vmatpush1.bf16.msra.mxu0 0
  %444 = vmatprep.subr.bf16.mxu0 0
  %445 = vmatpush1.bf16.msra.mxu0 0
  %446 = vmatprep.subr.bf16.mxu0 0
  %447 = vmatpush1.bf16.msra.mxu0 0
  %448 = vmatprep.subr.bf16.mxu0 0
  %449 = vmatpush1.bf16.msra.mxu0 %v422
  %450 = vmatprep.subr.bf16.mxu0 0
  %451 = vmatpush2.bf16.msra.mxu0 0
  %452 = vmatprep.subr.bf16.mxu0 0
  %453 = vmatpush2.bf16.msra.mxu0 0
  %454 = vmatprep.subr.bf16.mxu0 0
  %455 = vmatpush2.bf16.msra.mxu0 0
  %456 = vmatprep.subr.bf16.mxu0 0
  %457 = vmatpush2.bf16.msra.mxu0 0
  %458 = vmatprep.subr.bf16.mxu0 0
  %459 = vmatpush2.bf16.msra.mxu0 0
  %460 = vmatprep.subr.bf16.mxu0 0
  %461 = vmatpush2.bf16.msra.mxu0 0
  %462 = vmatprep.subr.bf16.mxu0 0
  %463 = vmatpush2.bf16.msra.mxu0 0
  %464 = vmatprep.subr.bf16.mxu0 0
  %465 = vmatpush2.bf16.msra.mxu0 0
  %466 = vmatprep.mubr.bf16.mxu0 0
  %467 = vmatmul.mubr.bf16.gmra.mxu0 %v432
  %v468 = vpop.f32.mrf.mxu0
  %v469 = vadd.f32 %v428, %v468
  %v470 = vpop.f32.mrf.mxu0
  %v471 = vpop.f32.mrf.mxu0
  %v472 = vpop.f32.mrf.mxu0
  %473 = vdwg.mxu0
  %vm474 = vcmp.gt.f32.partialorder %v469, 0.0
  %v475 = vmul.f32 %v469, 0.01
  %v476 = vsel %vm474, %v469, %v475
  %v477 = vpack.c.bf16 %v476, %v476
  %v478 = vld [vmem:[%s9] sm:$0x3]
  %v479 = vld [vmem:[%s10] sm:$0xf]
  %481 = vset.pattern.permute.xlu0 0
  %482 = vperm.xlu0 %481, %v479
  %v483 = vpop.permute.xlu0 %482
  %vm485 = vcmask 64512
  %v487 = vsel %vm485, %v478, 0
  %vm489 = vcmask 1043456
  %v491 = vsel %vm489, %v477, 0
  %493 = vmatprep.subr.bf16.mxu0 0
  %494 = vmatpush1.bf16.msra.mxu0 0
  %495 = vmatprep.subr.bf16.mxu0 0
  %496 = vmatpush1.bf16.msra.mxu0 0
  %497 = vmatprep.subr.bf16.mxu0 0
  %498 = vmatpush1.bf16.msra.mxu0 0
  %499 = vmatprep.subr.bf16.mxu0 0
  %500 = vmatpush1.bf16.msra.mxu0 0
  %501 = vmatprep.subr.bf16.mxu0 0
  %502 = vmatpush1.bf16.msra.mxu0 0
  %503 = vmatprep.subr.bf16.mxu0 0
  %504 = vmatpush1.bf16.msra.mxu0 0
  %505 = vmatprep.subr.bf16.mxu0 0
  %506 = vmatpush1.bf16.msra.mxu0 0
  %507 = vmatprep.subr.bf16.mxu0 0
  %508 = vmatpush1.bf16.msra.mxu0 %v491
  %509 = vmatprep.subr.bf16.mxu0 0
  %510 = vmatpush2.bf16.msra.mxu0 0
  %511 = vmatprep.subr.bf16.mxu0 0
  %512 = vmatpush2.bf16.msra.mxu0 0
  %513 = vmatprep.subr.bf16.mxu0 0
  %514 = vmatpush2.bf16.msra.mxu0 0
  %515 = vmatprep.subr.bf16.mxu0 0
  %516 = vmatpush2.bf16.msra.mxu0 0
  %517 = vmatprep.subr.bf16.mxu0 0
  %518 = vmatpush2.bf16.msra.mxu0 0
  %519 = vmatprep.subr.bf16.mxu0 0
  %520 = vmatpush2.bf16.msra.mxu0 0
  %521 = vmatprep.subr.bf16.mxu0 0
  %522 = vmatpush2.bf16.msra.mxu0 0
  %523 = vmatprep.subr.bf16.mxu0 0
  %524 = vmatpush2.bf16.msra.mxu0 0
  %525 = vmatprep.mubr.bf16.mxu0 0
  %526 = vmatmul.mubr.bf16.gmra.mxu0 %v487
  %v527 = vpop.f32.mrf.mxu0
  %v528 = vadd.f32 %v483, %v527
  %v529 = vpop.f32.mrf.mxu0
  %v530 = vpop.f32.mrf.mxu0
  %v531 = vpop.f32.mrf.mxu0
  %532 = vdwg.mxu0
  %vm533 = vcmp.gt.f32.partialorder %v528, 0.0
  %v534 = vmul.f32 %v528, 0.01
  %v535 = vsel %vm533, %v528, %v534
  %v536 = vpack.c.bf16 %v535, %v535
  %v537 = vld [vmem:[%s11] sm:$0x1]
  %v538 = vld [vmem:[#allocation2] sm:$0x1]
  %540 = vset.pattern.permute.xlu0 0
  %541 = vperm.xlu0 %540, %v538
  %v542 = vpop.permute.xlu0 %541
  %v544 = vlaneseq
  %v545 = vshrl.u32 %v544, 7
  %v546 = vsub.s32 0, %v545
  %v547 = vrot.slane %v542, %v546
  %vm548 = vcmask 31744
  %v550 = vsel %vm548, %v537, 0
  %vm552 = vcmask 1041408
  %v554 = vsel %vm552, %v536, 0
  %556 = vmatprep.subr.bf16.mxu0 0
  %557 = vmatpush1.bf16.msra.mxu0 0
  %558 = vmatprep.subr.bf16.mxu0 0
  %559 = vmatpush1.bf16.msra.mxu0 0
  %560 = vmatprep.subr.bf16.mxu0 0
  %561 = vmatpush1.bf16.msra.mxu0 0
  %562 = vmatprep.subr.bf16.mxu0 0
  %563 = vmatpush1.bf16.msra.mxu0 0
  %564 = vmatprep.subr.bf16.mxu0 0
  %565 = vmatpush1.bf16.msra.mxu0 0
  %566 = vmatprep.subr.bf16.mxu0 0
  %567 = vmatpush1.bf16.msra.mxu0 0
  %568 = vmatprep.subr.bf16.mxu0 0
  %569 = vmatpush1.bf16.msra.mxu0 0
  %570 = vmatprep.subr.bf16.mxu0 0
  %571 = vmatpush1.bf16.msra.mxu0 %v554
  %572 = vmatprep.subr.bf16.mxu0 0
  %573 = vmatpush2.bf16.msra.mxu0 0
  %574 = vmatprep.subr.bf16.mxu0 0
  %575 = vmatpush2.bf16.msra.mxu0 0
  %576 = vmatprep.subr.bf16.mxu0 0
  %577 = vmatpush2.bf16.msra.mxu0 0
  %578 = vmatprep.subr.bf16.mxu0 0
  %579 = vmatpush2.bf16.msra.mxu0 0
  %580 = vmatprep.subr.bf16.mxu0 0
  %581 = vmatpush2.bf16.msra.mxu0 0
  %582 = vmatprep.subr.bf16.mxu0 0
  %583 = vmatpush2.bf16.msra.mxu0 0
  %584 = vmatprep.subr.bf16.mxu0 0
  %585 = vmatpush2.bf16.msra.mxu0 0
  %586 = vmatprep.subr.bf16.mxu0 0
  %587 = vmatpush2.bf16.msra.mxu0 0
  %588 = vmatprep.mubr.bf16.mxu0 0
  %589 = vmatmul.mubr.bf16.gmra.mxu0 %v550
  %v590 = vpop.f32.mrf.mxu0
  %v591 = vadd.f32 %v547, %v590
  %v592 = vpop.f32.mrf.mxu0
  %v593 = vpop.f32.mrf.mxu0
  %v594 = vpop.f32.mrf.mxu0
  %595 = vdwg.mxu0
  %v596 = vsub.f32 0.0, %v591
  %v597 = vmul.f32 %v596, 1.442695
  %v598 = vpow.pop %v597
  %v599 = vadd.f32 %v598, 1.0
  %v600 = vrcp.pop %v599
  %601 = vst [vmem:[%s13] sm:$0x1] %v600
  // Predicated region
  $region54: #{discriminator_forward.1} parent=0 // pred_check
    _
  $region55: #{discriminator_forward.1} parent=0 // pred_check_branch
    %603 = sbr.rel (0) target = $region57
  $region56: #{discriminator_forward.1} parent=0 // pred_region
    _
  $region57: #{discriminator_forward.1} parent=0 // pred_fallthru
    _
  // Predicated region
  $region58: #{discriminator_forward.1} parent=0 // pred_check
    _
  $region59: #{discriminator_forward.1} parent=0 // pred_check_branch
    %605 = sbr.rel (0) target = $region61
  $region60: #{discriminator_forward.1} parent=0 // pred_region
    _
  $region61: #{discriminator_forward.1} parent=0 // pred_fallthru
    _

</llo_original>
